<compile_context>
chip_gen: v6e
topology: v6e:2x2x1
jax: 0.10.0
libtpu: 0.0.40
codegen_flags: <defaults>
</compile_context>

<pallas_src>
import functools
import math

import jax
import jax.numpy as jnp
from jax.experimental import pallas as pl
from jax.experimental.pallas import tpu as pltpu

_MAX_LANES = 2048              # widest lane-dense slab considered (multiple of 128)
_TARGET_BLOCK_BYTES = 2 << 20  # ~2 MiB per block; 4x (in+out double-buffer) = 8 MiB

# Giles (2010) single-precision polynomial approximation of erfinv(x).
_GILES_CENTRAL = (2.81022636e-08, 3.43273939e-07, -3.5233877e-06,
                  -4.39150654e-06, 0.00021858087, -0.00125372503,
                  -0.00417768164, 0.246640727, 1.50140941)
_GILES_TAIL = (-0.000200214257, 0.000100950558, 0.00134934322,
               -0.00367342844, 0.00573950773, -0.0076224613,
               0.00943887047, 1.00167406, 2.83297682)
_SQRT2 = math.sqrt(2.0)


def _round_up(n, m):
    return ((n + m - 1) // m) * m


def _poly(coeffs, t):
    # Horner chain; dtype follows `t` (bf16 on the hot path -> cheap VALU work
    # on v6e/v7x, harmlessly emulated on the HBM-bound v5e).
    acc = jnp.full_like(t, coeffs[0])
    for c in coeffs[1:]:
        acc = acc * t + c
    return acc


def _noise_kernel_tpu(seed_ref, x_ref, o_ref, *, scale):
    # Per-tile seed: mix the user seed with the grid position so every tile
    # draws independent noise (identical re-seeding would tile-repeat noise).
    pltpu.prng_seed(seed_ref[0], pl.program_id(0))
    bits = pltpu.bitcast(pltpu.prng_random_bits(x_ref.shape), jnp.uint32)

    # 23 uniform bits per sample (exact in f32) -> u in (0,1) -> z via
    # z = sqrt(2) * erfinv(2u - 1).  Note: 23 bits quantize the extreme tails
    # (|z| capped at ~5.1), which is irrelevant for sigma=0.2 noise injection.
    k = (bits & 0x7FFFFF).astype(jnp.float32)
    u = (k + 0.5) * jnp.float32(1.0 / (1 << 23))
    xu = 2.0 * u - 1.0                                  # uniform in (-1, 1)
    w = -jnp.log((1.0 - xu) * (1.0 + xu))               # = -log(1 - xu^2), f32/EUP

    # Giles erfinv polynomials in bf16 (half the f32 VALU cost on v6e/v7x).
    wb = w.astype(jnp.bfloat16)
    p_central = _poly(_GILES_CENTRAL, wb - 2.5)
    tb = (jnp.sqrt(jnp.maximum(w, 5.0)) - 3.0).astype(jnp.bfloat16)
    p_tail = _poly(_GILES_TAIL, tb)
    p = jnp.where(w < 5.0, p_central, p_tail).astype(jnp.float32)

    # z = sqrt(2) * p * xu ;  out = x + sigma*z = x + (sigma*sqrt(2)) * (p*xu)
    o_ref[...] = (x_ref[...].astype(jnp.float32)
                  + jnp.float32(scale) * (p * xu)).astype(o_ref.dtype)


def _add_scaled_kernel(x_ref, n_ref, o_ref, *, sigma):
    o_ref[...] = (x_ref[...].astype(jnp.float32)
                  + jnp.float32(sigma) * n_ref[...].astype(jnp.float32)
                  ).astype(o_ref.dtype)


def noise_forward(x, seed=0, use_noise=True, sigma=0.2):
    """JAX/Pallas equivalent of Noise(use_noise, sigma).forward(x)."""
    # TODO(synk): to match torch's per-call `.normal_()` semantics, callers must
    # thread a fresh `seed` each forward call; a fixed seed repeats the noise.
    if not use_noise:
        return x

    orig_shape = x.shape
    total = x.size
    itemsize = jnp.dtype(x.dtype).itemsize

    # ---- Lane-dense 2-D slab without any pad/slice pass when possible ------
    lanes = 0
    for cand in range(_MAX_LANES, 127, -128):
        if total % cand == 0:
            lanes = cand
            break
    if lanes:
        rows = total // lanes
        x2 = x.reshape(rows, lanes)          # layout plumbing only, no copy pass
        padded = False
    else:
        # Rare fallback (total not a multiple of 128): minimal pad to (rows,128).
        lanes = 128
        rows = pl.cdiv(total, lanes)
        x2 = jnp.pad(jnp.ravel(x), (0, rows * lanes - total)).reshape(rows, lanes)
        padded = True

    # ---- Block sizing: ~2 MiB blocks; >=2 blocks when splittable so the
    # "parallel" grid axis can shard across v7x's two TensorCores. -----------
    target_rows = max(8, (_TARGET_BLOCK_BYTES // (lanes * itemsize)) // 8 * 8)
    blk_rows = rows if rows <= target_rows else target_rows
    if rows >= 16 and pl.cdiv(rows, blk_rows) < 2:
        blk_rows = _round_up(pl.cdiv(rows, 2), 8)       # multiple of 8, < rows
    grid = (pl.cdiv(rows, blk_rows),)                    # ragged tail handled by Pallas

    block = pl.BlockSpec((blk_rows, lanes), lambda i: (i, 0))
    out_shape = jax.ShapeDtypeStruct((rows, lanes), x.dtype)

    if jax.default_backend() == "tpu":
        # Hot path: in-kernel HW PRNG -> HBM traffic = read x + write out.
        seed_arr = jnp.asarray([seed], dtype=jnp.int32)
        slab = rows * lanes
        out2 = pl.pallas_call(
            functools.partial(_noise_kernel_tpu, scale=float(sigma) * _SQRT2),
            out_shape=out_shape,
            grid=grid,
            in_specs=[pl.BlockSpec(memory_space=pltpu.SMEM),  # scalar seed
                      block],
            out_specs=block,
            input_output_aliases={1: 0},   # x2 is a wrapper temporary -> safe
            compiler_params=pltpu.CompilerParams(
                dimension_semantics=("parallel",)),
            cost_estimate=pl.CostEstimate(
                flops=45 * slab,
                transcendentals=2 * slab,
                bytes_accessed=2 * slab * itemsize),
        )(seed_arr, x2)
    else:
        # Portable fallback (CPU / interpret): TPU PRNG primitives have no
        # lowering off-TPU, so draw normals with jax.random, fuse scale+add.
        z = jax.random.normal(jax.random.PRNGKey(seed), (rows, lanes),
                              dtype=jnp.float32)
        out2 = pl.pallas_call(
            functools.partial(_add_scaled_kernel, sigma=float(sigma)),
            out_shape=out_shape,
            grid=grid,
            in_specs=[block, block],
            out_specs=block,
        )(x2, z)

    if padded:
        return out2.reshape(-1)[:total].reshape(orig_shape)
    return out2.reshape(orig_shape)


if __name__ == "__main__":
    key = jax.random.PRNGKey(0)
    x = jax.random.normal(key, (2, 4, 16, 16), dtype=jnp.float32)  # NCHW

    # use_noise=True (the Pallas-kernel hot path)
    y = noise_forward(x, seed=1234, use_noise=True, sigma=0.2)
    y = jax.block_until_ready(y)

    # use_noise=False (identity)
    y_id = noise_forward(x, use_noise=False)
    y_id = jax.block_until_ready(y_id)

    # Sanity checks: shape/dtype preserved; noise present, bounded, plausible
    # statistics for sigma=0.2; identity path exact.
    assert y.shape == x.shape and y.dtype == x.dtype
    diff = y - x
    assert not bool(jnp.allclose(y, x))
    assert bool(jnp.all(jnp.abs(diff) < 2.0))           # |0.2 * z| well-bounded
    mean = float(jnp.mean(diff))
    std = float(jnp.std(diff))
    assert abs(mean) < 0.05 and 0.1 < std < 0.3
    assert bool(jnp.array_equal(y_id, x))

    print("KERNEL_OK")
</pallas_src>

<mosaic_0001>
module attributes {stable_mosaic.version = 11 : i64} {
  func.func @_add_scaled_kernel(%arg0: i32, %arg1: memref<1x2048xf32, #tpu.memory_space<vmem>>, %arg2: memref<1x2048xf32, #tpu.memory_space<vmem>>, %arg3: memref<1x2048xf32, #tpu.memory_space<vmem>>) attributes {dimension_semantics = [#tpu.dimension_semantics<arbitrary>], iteration_bounds = array<i64: 1>, scalar_prefetch = 0 : i64, scratch_operands = 0 : i64, tpu.core_type = #tpu.core_type<tc>, window_params = [{transform_indices = @transform_0, window_bounds = array<i64: 1, 2048>}, {transform_indices = @transform_1, window_bounds = array<i64: 1, 2048>}, {transform_indices = @transform_2, window_bounds = array<i64: 1, 2048>}]} {
    %c0 = arith.constant 0 : index
    %c0_0 = arith.constant 0 : index
    %0 = vector.load %arg1[%c0, %c0_0] : memref<1x2048xf32, #tpu.memory_space<vmem>>, vector<1x2048xf32>
    %c0_1 = arith.constant 0 : index
    %c0_2 = arith.constant 0 : index
    %1 = vector.load %arg2[%c0_1, %c0_2] : memref<1x2048xf32, #tpu.memory_space<vmem>>, vector<1x2048xf32>
    %cst = arith.constant 2.000000e-01 : f32
    %2 = vector.broadcast %cst : f32 to vector<1x2048xf32>
    %3 = arith.mulf %2, %1 : vector<1x2048xf32>
    %4 = arith.addf %0, %3 : vector<1x2048xf32>
    %c0_3 = arith.constant 0 : index
    %c0_4 = arith.constant 0 : index
    %5 = vector.load %arg3[%c0_3, %c0_4] : memref<1x2048xf32, #tpu.memory_space<vmem>>, vector<1x2048xf32>
    tpu.vector_store %arg3[%c0_3, %c0_4], %4 {strides = array<i32>} : memref<1x2048xf32, #tpu.memory_space<vmem>>, vector<1x2048xf32>,
    return
  }
  func.func @transform_0(%arg0: i32) -> (i32, i32) {
    %c0_i32 = arith.constant 0 : i32
    %c0_i32_0 = arith.constant 0 : i32
    return %arg0, %c0_i32 : i32, i32
  }
  func.func @transform_1(%arg0: i32) -> (i32, i32) {
    %c0_i32 = arith.constant 0 : i32
    %c0_i32_0 = arith.constant 0 : i32
    return %arg0, %c0_i32 : i32, i32
  }
  func.func @transform_2(%arg0: i32) -> (i32, i32) {
    %c0_i32 = arith.constant 0 : i32
    %c0_i32_0 = arith.constant 0 : i32
    return %arg0, %c0_i32 : i32, i32
  }
}

</mosaic_0001>

<llo_original>
// kernel: tpu_custom_call.1
$region0: #{tpu_custom_call.1}
  #allocation0 [shape = 'u32[]', space=smem, size = 0x4, offset = 0x4, fixed_abs, tag = 'smem constant byte address 0x4 - core index']
  #allocation1 [shape = 'u32[144,128]{1,0:T(1,128)}', space=vmem, size = 0x12000, scoped, tag = 'internal scratch']
  %s0 = inlined_call_operand.hbm [shape: f32[1,2048], index: 0, kind: input, shape index: {}]
  %s1 = inlined_call_operand.hbm [shape: f32[1,2048], index: 1, kind: input, shape index: {}]
  %s2 = inlined_call_operand.hbm [shape: f32[1,2048], index: 2, kind: output, shape index: {}]
  %s3 = sld [smem:[#allocation0]]
  $region26: #{tpu_custom_call.1} parent=0
    _
  %s5 = ssub.s32 1, %s3
  %s6 = scalar_select 0, %s5, %s3
  $region1: #{tpu_custom_call.1} parent=0
    #allocation2 [shape = 'u8[8192]{0}', space=vmem, size = 0x2000, scoped, tag = 'input window, operand 0, single buffered']
    #allocation3 [shape = 's32[1]{0}', space=sflag, size = 0x4, scoped, tag = 'scoped memory for tpu_custom_call.1']
    #allocation4 [shape = 's32[1]{0}', space=sflag, size = 0x4, scoped, tag = 'scoped memory for tpu_custom_call.1']
    #allocation5 [shape = 'u8[8192]{0}', space=vmem, size = 0x2000, scoped, tag = 'input window, operand 1, single buffered']
    #allocation6 [shape = 's32[1]{0}', space=sflag, size = 0x4, scoped, tag = 'scoped memory for tpu_custom_call.1']
    #allocation7 [shape = 'u8[8192]{0}', space=vmem, size = 0x2000, scoped, tag = 'output window, operand 0, single buffered']
    %7 = vsyncpa [#allocation3], 0
    %8 = vsyncpa [#allocation6], 0
    %9 = vsyncpa [#allocation4], 0
    // Predicated region
    $region2: #{tpu_custom_call.1} parent=1 // pred_check
      _
    $region3: #{tpu_custom_call.1} parent=1 // pred_check_branch
      %11 = sbr.rel (0) target = $region5
    $region4: #{tpu_custom_call.1} parent=1 // pred_region
      %s13 = ssub.s32 256, 256
      %14 = vsyncadd [#allocation3], %s13
      %s16 = sshll.u32 [#allocation2], 4
      %s17 = int_to_ptr.vmem [resolvable:$true] %s16
      %19 = dma.hbm_to_vmem [thread:$0]  %s0, 256, %s17, [#allocation3]
    $region5: #{tpu_custom_call.1} parent=1 // pred_fallthru
      _
    // Predicated region
    $region6: #{tpu_custom_call.1} parent=1 // pred_check
      _
    $region7: #{tpu_custom_call.1} parent=1 // pred_check_branch
      %21 = sbr.rel (0) target = $region9
    $region8: #{tpu_custom_call.1} parent=1 // pred_region
      %s23 = ssub.s32 256, 256
      %24 = vsyncadd [#allocation6], %s23
      %s26 = sshll.u32 [#allocation5], 4
      %s27 = int_to_ptr.vmem [resolvable:$true] %s26
      %29 = dma.hbm_to_vmem [thread:$0]  %s1, 256, %s27, [#allocation6]
    $region9: #{tpu_custom_call.1} parent=1 // pred_fallthru
      _
    // Predicated region
    $region10: #{tpu_custom_call.1} parent=1 // pred_check
      _
    $region11: #{tpu_custom_call.1} parent=1 // pred_check_branch
      %31 = sbr.rel (0) target = $region13
    $region12: #{tpu_custom_call.1} parent=1 // pred_region
      %32 = dma.done [#allocation3], 256
    $region13: #{tpu_custom_call.1} parent=1 // pred_fallthru
      _
    // Predicated region
    $region14: #{tpu_custom_call.1} parent=1 // pred_check
      _
    $region15: #{tpu_custom_call.1} parent=1 // pred_check_branch
      %34 = sbr.rel (0) target = $region17
    $region16: #{tpu_custom_call.1} parent=1 // pred_region
      %35 = dma.done [#allocation6], 256
    $region17: #{tpu_custom_call.1} parent=1 // pred_fallthru
      _
    %v36 = vld [vmem:[#allocation2] sm:$0xff]
    %v37 = vld [vmem:[#allocation2 + $0x8] sm:$0xff]
    %v38 = vld [vmem:[#allocation5] sm:$0xff]
    %v39 = vld [vmem:[#allocation5 + $0x8] sm:$0xff]
    %v40 = vmul.f32 %v38, 0.2
    %v41 = vmul.f32 %v39, 0.2
    %v42 = vadd.f32 %v36, %v40
    %v43 = vadd.f32 %v37, %v41
    %44 = vst [vmem:[#allocation7] sm:$0xff] %v42
    %45 = vst [vmem:[#allocation7 + $0x8] sm:$0xff] %v43
    // Predicated region
    $region18: #{tpu_custom_call.1} parent=1 // pred_check
      _
    $region19: #{tpu_custom_call.1} parent=1 // pred_check_branch
      %47 = sbr.rel (0) target = $region21
    $region20: #{tpu_custom_call.1} parent=1 // pred_region
      %s49 = ssub.s32 256, 256
      %50 = vsyncadd [#allocation4], %s49
      %s52 = sshll.u32 [#allocation7], 4
      %s53 = int_to_ptr.vmem [resolvable:$true] %s52
      %55 = dma.vmem_to_hbm [thread:$0]  %s53, 256, %s2, [#allocation4]
    $region21: #{tpu_custom_call.1} parent=1 // pred_fallthru
      _
    // Predicated region
    $region22: #{tpu_custom_call.1} parent=1 // pred_check
      _
    $region23: #{tpu_custom_call.1} parent=1 // pred_check_branch
      %57 = sbr.rel (0) target = $region25
    $region24: #{tpu_custom_call.1} parent=1 // pred_region
      %58 = dma.done [#allocation4], 256
    $region25: #{tpu_custom_call.1} parent=1 // pred_fallthru
      _
    %59 = vsyncpa [#allocation3], 1
    %60 = vsyncpa [#allocation6], 1
    %61 = vsyncpa [#allocation4], 1

</llo_original>
